<compile_context>
chip_gen: v7x
topology: tpu7x:2x2x1
jax: 0.10.0
libtpu: 0.0.40
codegen_flags: <defaults>
</compile_context>

<pallas_src>
import functools

import jax
import jax.numpy as jnp
from jax.experimental import pallas as pl
from jax.experimental.pallas import tpu as pltpu


def _round_up(x, m):
    return ((x + m - 1) // m) * m


def _gelu_tanh(x):
    # GELU, tanh approximation (matches nn.GELU(approximate='tanh')).
    c = 0.7978845608028654  # sqrt(2/pi)
    return 0.5 * x * (1.0 + jnp.tanh(c * (x + 0.044715 * x * x * x)))


def moe_mlp_kernel(x_ref, w1_ref, b1_ref, w2_ref, b2_ref,
                   wd_ref, bd_ref, wr_ref, br_ref, o_ref, sm_ref,
                   *, dim, num_experts, active_experts):
    k = pl.program_id(1)

    # ---- k == 0: router softmax (cached in VMEM scratch) + accumulator init.
    @pl.when(k == 0)
    def _init():
        x_f32 = x_ref[...]                                        # (tn, dim)
        # Router kept in f32 (tiny matmul; exact expert selection), lane-padded
        # to a multiple of 128 so the score/top-k/softmax path is lane-dense.
        scores = jnp.dot(x_f32, wr_ref[...],
                         preferred_element_type=jnp.float32) + br_ref[...]
        neg = jnp.float32(-1e30)
        lane = jax.lax.broadcasted_iota(jnp.int32, scores.shape, dimension=1)
        lane_f = lane.astype(jnp.float32)
        valid = lane < num_experts
        scores = jnp.where(valid, scores, neg)    # padded lanes never selected

        # k-th largest score (counting multiplicity) == min(top_k): remove
        # exactly one occurrence of the running max, active_experts times.
        s_work = scores
        thr = jnp.full((scores.shape[0], 1), neg, jnp.float32)
        for _ in range(active_experts):
            thr = jnp.max(s_work, axis=-1, keepdims=True)
            is_max = s_work == thr
            first = jnp.min(jnp.where(is_max, lane_f, jnp.float32(1e9)),
                            axis=-1, keepdims=True)
            s_work = jnp.where(lane_f == first, neg, s_work)

        # Zero below-threshold scores, softmax over ALL real experts (zeros
        # included, exactly as in the PyTorch reference).
        masked = jnp.where(scores < thr, jnp.zeros_like(scores), scores)
        masked = jnp.where(valid, masked, neg)
        m = jnp.max(masked, axis=-1, keepdims=True)
        p = jnp.exp(masked - m)
        inv = pl.reciprocal(jnp.sum(p, axis=-1, keepdims=True), approx=True)
        sm_ref[...] = p * inv                                     # (tn, E_pad)

        o_ref[...] = jnp.zeros_like(o_ref)                        # init acc

    # ---- every k step: up-proj chunk + GLU + fused weighted down-projection.
    x_bf = x_ref[...].astype(jnp.bfloat16)
    x1 = jnp.dot(x_bf, w1_ref[...],
                 preferred_element_type=jnp.float32) + b1_ref[...]   # (tn, tk)
    x2 = jnp.dot(x_bf, w2_ref[...],
                 preferred_element_type=jnp.float32) + b2_ref[...]
    # GLU in f32 (portable to v5e), cast only for the MXU.
    h = (x1 * _gelu_tanh(x2)).astype(jnp.bfloat16)                   # (tn, tk)

    sm = sm_ref[...]
    acc = o_ref[...]
    for e in range(num_experts):
        # Expert-major wd columns -> static contiguous slices of the ref.
        ze = jnp.dot(h, wd_ref[:, e * dim:(e + 1) * dim],
                     preferred_element_type=jnp.float32)             # (tn, dim)
        acc = acc + ze * sm[:, e:e + 1]
    o_ref[...] = acc

    # ---- last k step: add the softmax-weighted down-projection bias.
    @pl.when(k == pl.num_programs(1) - 1)
    def _finalize():
        o_ref[...] += jnp.dot(sm_ref[...], bd_ref[...],
                              preferred_element_type=jnp.float32)


def prepare_params(params, *, dim, dim_inner, num_experts, tile_k=512):
    """One-time parameter preprocessing (run once, not per forward call)."""
    w1, b1, w2, b2, wd, bd, wr, br = params
    K = dim_inner * num_experts

    # K-chunk size: multiple of 128 lanes, clamped to (padded) K.
    tk = max(128, (min(tile_k, _round_up(K, 128)) // 128) * 128)
    k_pad = _round_up(K, tk)
    e_pad = _round_up(num_experts, 128)

    # Permute down-projection outputs from PyTorch order (d*E + e) to
    # expert-major order (e*dim + d) for contiguous per-expert slices, and
    # reshape its bias to an (E, dim) matrix for the finalize matmul.
    wd_perm = wd.reshape(K, dim, num_experts).transpose(0, 2, 1)
    wd_perm = wd_perm.reshape(K, num_experts * dim)
    bd_mat = bd.reshape(dim, num_experts).T                      # (E, dim)

    def pad_cols(a, n):
        return jnp.pad(a, ((0, 0), (0, n - a.shape[1])))

    def pad_rows(a, n):
        return jnp.pad(a, ((0, n - a.shape[0]), (0, 0)))

    # Big matmul operands in bf16 (f32 accumulation in the kernel); biases and
    # the router stay f32.  Zero K-padding contributes nothing (0 * gelu(0)).
    return dict(
        w1=pad_cols(w1, k_pad).astype(jnp.bfloat16),
        b1=pad_cols(b1.reshape(1, -1), k_pad).astype(jnp.float32),
        w2=pad_cols(w2, k_pad).astype(jnp.bfloat16),
        b2=pad_cols(b2.reshape(1, -1), k_pad).astype(jnp.float32),
        wd=pad_rows(wd_perm, k_pad).astype(jnp.bfloat16),
        bd=pad_rows(bd_mat, e_pad).astype(jnp.float32),
        wr=pad_cols(wr, e_pad).astype(jnp.float32),
        br=pad_cols(br.reshape(1, -1), e_pad).astype(jnp.float32),
        tk=tk, k_pad=k_pad, e_pad=e_pad,
    )


def moe_mlp_forward(x, prepped, *, dim, num_experts, active_experts,
                    tile_n=256, vmem_limit_bytes=48 * 1024 * 1024):
    """x: (B, S, dim) f32. prepped: output of prepare_params. Returns (B, S, dim)."""
    B, S, D = x.shape
    assert D == dim
    N = B * S
    x2d = x.reshape(N, dim)

    # Token tile: multiple of 8 sublanes, as large as the input allows.
    tn = min(tile_n, _round_up(N, 8))
    tn = max(8, (tn // 8) * 8)
    n_pad = pl.cdiv(N, tn) * tn
    if n_pad != N:
        x2d = jnp.pad(x2d, ((0, n_pad - N), (0, 0)))

    tk = prepped["tk"]
    k_pad = prepped["k_pad"]
    e_pad = prepped["e_pad"]
    e_dim = num_experts * dim

    kernel = functools.partial(
        moe_mlp_kernel, dim=dim, num_experts=num_experts,
        active_experts=active_experts)

    grid = (n_pad // tn, k_pad // tk)   # (tokens, K-reduction) — reduction last

    in_specs = [
        pl.BlockSpec((tn, dim), lambda i, k: (i, 0)),       # x   (K-invariant)
        pl.BlockSpec((dim, tk), lambda i, k: (0, k)),       # w1  (streamed over K)
        pl.BlockSpec((1, tk),   lambda i, k: (0, k)),       # b1
        pl.BlockSpec((dim, tk), lambda i, k: (0, k)),       # w2
        pl.BlockSpec((1, tk),   lambda i, k: (0, k)),       # b2
        pl.BlockSpec((tk, e_dim), lambda i, k: (k, 0)),     # wd  (streamed over K)
        pl.BlockSpec((e_pad, dim), lambda i, k: (0, 0)),    # bd  (expert-major)
        pl.BlockSpec((dim, e_pad), lambda i, k: (0, 0)),    # router W (lane-padded)
        pl.BlockSpec((1, e_pad),   lambda i, k: (0, 0)),    # router b
    ]

    out2d = pl.pallas_call(
        kernel,
        out_shape=jax.ShapeDtypeStruct((n_pad, dim), x.dtype),
        grid_spec=pltpu.PrefetchScalarGridSpec(
            num_scalar_prefetch=0,
            grid=grid,
            in_specs=in_specs,
            # Same output block across the K axis -> resident f32 accumulator.
            out_specs=pl.BlockSpec((tn, dim), lambda i, k: (i, 0)),
            scratch_shapes=[pltpu.VMEM((tn, e_pad), jnp.float32)],  # softmax gates
        ),
        compiler_params=pltpu.CompilerParams(
            dimension_semantics=("parallel", "arbitrary"),
            vmem_limit_bytes=vmem_limit_bytes),
    )(x2d, prepped["w1"], prepped["b1"], prepped["w2"], prepped["b2"],
      prepped["wd"], prepped["bd"], prepped["wr"], prepped["br"])

    return out2d[:N].reshape(B, S, dim)


def moe_mlp_reference(x, params, *, dim, num_experts, active_experts):
    """Pure-JAX f32 replica of the PyTorch forward (for validation)."""
    w1, b1, w2, b2, wd, bd, wr, br = params
    x1 = x @ w1 + b1
    x2 = x @ w2 + b2
    z = (x1 * _gelu_tanh(x2)) @ wd + bd              # (B, S, dim*E), order d*E+e
    scores = x @ wr + br                             # (B, S, E)
    topk = jax.lax.top_k(scores, active_experts)[0]
    min_score = jnp.min(topk, axis=-1, keepdims=True)
    scores = jnp.where(scores < min_score, jnp.zeros_like(scores), scores)
    sm = jax.nn.softmax(scores, axis=-1)
    z = z.reshape(*z.shape[:-1], dim, num_experts)
    return (z * sm[..., None, :]).sum(-1)


def init_params(key, dim, dim_inner, num_experts):
    K = dim_inner * num_experts
    ks = jax.random.split(key, 8)
    scale = 0.05
    w1 = scale * jax.random.normal(ks[0], (dim, K), jnp.float32)
    b1 = scale * jax.random.normal(ks[1], (K,), jnp.float32)
    w2 = scale * jax.random.normal(ks[2], (dim, K), jnp.float32)
    b2 = scale * jax.random.normal(ks[3], (K,), jnp.float32)
    wd = scale * jax.random.normal(ks[4], (K, dim * num_experts), jnp.float32)
    bd = scale * jax.random.normal(ks[5], (dim * num_experts,), jnp.float32)
    wr = scale * jax.random.normal(ks[6], (dim, num_experts), jnp.float32)
    br = scale * jax.random.normal(ks[7], (num_experts,), jnp.float32)
    return (w1, b1, w2, b2, wd, bd, wr, br)


if __name__ == "__main__":
    B, S, dim = 2, 8, 32
    dim_inner = 32
    num_experts = 4
    active_experts = 2

    key = jax.random.PRNGKey(0)
    kx, kp = jax.random.split(key)
    x = jax.random.normal(kx, (B, S, dim), jnp.float32)
    params = init_params(kp, dim, dim_inner, num_experts)

    # One-time parameter prep (permutation / padding / bf16 cast) done here,
    # NOT inside the per-call forward path.
    prepped = prepare_params(params, dim=dim, dim_inner=dim_inner,
                             num_experts=num_experts)

    out = moe_mlp_forward(
        x, prepped, dim=dim, num_experts=num_experts,
        active_experts=active_experts)
    out = jax.block_until_ready(out)

    ref = moe_mlp_reference(
        x, params, dim=dim, num_experts=num_experts,
        active_experts=active_experts)
    assert out.shape == (B, S, dim)
    # Tolerance loosened vs pure-f32 because the big matmuls run bf16->f32.
    err = jnp.max(jnp.abs(out - ref))
    assert jnp.allclose(out, ref, atol=5e-3, rtol=5e-2), f"mismatch: max |diff|={err}"

    print("KERNEL_OK")
</pallas_src>

<mosaic_0001>
module attributes {stable_mosaic.version = 11 : i64} {
  func.func @moe_mlp_kernel(%arg0: i32, %arg1: i32, %arg2: memref<16x32xf32, #tpu.memory_space<vmem>>, %arg3: memref<32x128xbf16, #tpu.memory_space<vmem>>, %arg4: memref<1x128xf32, #tpu.memory_space<vmem>>, %arg5: memref<32x128xbf16, #tpu.memory_space<vmem>>, %arg6: memref<1x128xf32, #tpu.memory_space<vmem>>, %arg7: memref<128x128xbf16, #tpu.memory_space<vmem>>, %arg8: memref<128x32xf32, #tpu.memory_space<vmem>>, %arg9: memref<32x128xf32, #tpu.memory_space<vmem>>, %arg10: memref<1x128xf32, #tpu.memory_space<vmem>>, %arg11: memref<16x32xf32, #tpu.memory_space<vmem>>, %arg12: memref<16x128xf32, #tpu.memory_space<vmem>>) attributes {dimension_semantics = [#tpu.dimension_semantics<parallel>, #tpu.dimension_semantics<arbitrary>], iteration_bounds = array<i64: 1, 1>, scalar_prefetch = 0 : i64, scratch_operands = 1 : i64, tpu.core_type = #tpu.core_type<tc>, window_params = [{transform_indices = @transform_0, window_bounds = array<i64: 16, 32>}, {transform_indices = @transform_1, window_bounds = array<i64: 32, 128>}, {transform_indices = @transform_2, window_bounds = array<i64: 1, 128>}, {transform_indices = @transform_3, window_bounds = array<i64: 32, 128>}, {transform_indices = @transform_4, window_bounds = array<i64: 1, 128>}, {transform_indices = @transform_5, window_bounds = array<i64: 128, 128>}, {pipeline_mode = #tpu.pipeline_mode<synchronous>, transform_indices = @transform_6, window_bounds = array<i64: 128, 32>}, {pipeline_mode = #tpu.pipeline_mode<synchronous>, transform_indices = @transform_7, window_bounds = array<i64: 32, 128>}, {pipeline_mode = #tpu.pipeline_mode<synchronous>, transform_indices = @transform_8, window_bounds = array<i64: 1, 128>}, {transform_indices = @transform_9, window_bounds = array<i64: 16, 32>}]} {
    %c0_i32 = arith.constant 0 : i32
    %0 = arith.cmpi eq, %arg1, %c0_i32 : i32
    %1 = arith.extui %0 : i1 to i32
    %c0_i32_0 = arith.constant 0 : i32
    %2 = arith.cmpi ne, %1, %c0_i32_0 : i32
    scf.if %2 {
      %c0_32 = arith.constant 0 : index
      %c0_33 = arith.constant 0 : index
      %60 = vector.load %arg2[%c0_32, %c0_33] : memref<16x32xf32, #tpu.memory_space<vmem>>, vector<16x32xf32>
      %c0_34 = arith.constant 0 : index
      %c0_35 = arith.constant 0 : index
      %61 = vector.load %arg9[%c0_34, %c0_35] : memref<32x128xf32, #tpu.memory_space<vmem>>, vector<32x128xf32>
      %cst_36 = arith.constant dense<0.000000e+00> : vector<16x128xf32>
      %62 = tpu.matmul %60, %61, %cst_36 {dimension_numbers = #tpu.dot_dimension_numbers<[1], [0], [0], [1], [0, 0, 1, 1], [], []>} : vector<16x32xf32>, vector<32x128xf32>, vector<16x128xf32> -> vector<16x128xf32>
      %c0_37 = arith.constant 0 : index
      %c0_38 = arith.constant 0 : index
      %63 = vector.load %arg10[%c0_37, %c0_38] : memref<1x128xf32, #tpu.memory_space<vmem>>, vector<1x128xf32>
      %64 = vector.broadcast %63 : vector<1x128xf32> to vector<16x128xf32>
      %65 = arith.addf %62, %64 : vector<16x128xf32>
      %66 = tpu.iota {dimensions = array<i32: 1>} : vector<16x128xi32>
      %67 = arith.sitofp %66 : vector<16x128xi32> to vector<16x128xf32>
      %c4_i32 = arith.constant 4 : i32
      %68 = vector.broadcast %c4_i32 : i32 to vector<16x128xi32>
      %69 = arith.cmpi slt, %66, %68 : vector<16x128xi32>
      %cst_39 = arith.constant -1.000000e+30 : f32
      %70 = vector.broadcast %cst_39 : f32 to vector<16x128xf32>
      %71 = arith.select %69, %65, %70 : vector<16x128xi1>, vector<16x128xf32>
      %cst_40 = arith.constant dense<0xFF800000> : vector<16xf32>
      %72 = vector.multi_reduction <maximumf>, %71, %cst_40 [1] : vector<16x128xf32> to vector<16xf32>
      %73 = vector.shape_cast %72 : vector<16xf32> to vector<16x1xf32>
      %74 = vector.broadcast %73 : vector<16x1xf32> to vector<16x128xf32>
      %75 = arith.cmpf oeq, %71, %74 : vector<16x128xf32>
      %cst_41 = arith.constant 1.000000e+09 : f32
      %76 = vector.broadcast %cst_41 : f32 to vector<16x128xf32>
      %77 = arith.select %75, %67, %76 : vector<16x128xi1>, vector<16x128xf32>
      %cst_42 = arith.constant dense<0x7F800000> : vector<16xf32>
      %78 = vector.multi_reduction <minimumf>, %77, %cst_42 [1] : vector<16x128xf32> to vector<16xf32>
      %79 = vector.shape_cast %78 : vector<16xf32> to vector<16x1xf32>
      %80 = vector.broadcast %79 : vector<16x1xf32> to vector<16x128xf32>
      %81 = arith.cmpf oeq, %67, %80 : vector<16x128xf32>
      %cst_43 = arith.constant -1.000000e+30 : f32
      %82 = vector.broadcast %cst_43 : f32 to vector<16x128xf32>
      %83 = arith.select %81, %82, %71 : vector<16x128xi1>, vector<16x128xf32>
      %cst_44 = arith.constant dense<0xFF800000> : vector<16xf32>
      %84 = vector.multi_reduction <maximumf>, %83, %cst_44 [1] : vector<16x128xf32> to vector<16xf32>
      %85 = vector.shape_cast %84 : vector<16xf32> to vector<16x1xf32>
      %86 = vector.broadcast %85 : vector<16x1xf32> to vector<16x128xf32>
      %87 = arith.cmpf olt, %71, %86 : vector<16x128xf32>
      %cst_45 = arith.constant 0.000000e+00 : f32
      %88 = vector.broadcast %cst_45 : f32 to vector<16x128xf32>
      %89 = arith.select %87, %88, %71 : vector<16x128xi1>, vector<16x128xf32>
      %cst_46 = arith.constant -1.000000e+30 : f32
      %90 = vector.broadcast %cst_46 : f32 to vector<16x128xf32>
      %91 = arith.select %69, %89, %90 : vector<16x128xi1>, vector<16x128xf32>
      %cst_47 = arith.constant dense<0xFF800000> : vector<16xf32>
      %92 = vector.multi_reduction <maximumf>, %91, %cst_47 [1] : vector<16x128xf32> to vector<16xf32>
      %93 = vector.shape_cast %92 : vector<16xf32> to vector<16x1xf32>
      %94 = vector.broadcast %93 : vector<16x1xf32> to vector<16x128xf32>
      %95 = arith.subf %91, %94 : vector<16x128xf32>
      %96 = math.exp %95 : vector<16x128xf32>
      %cst_48 = arith.constant dense<0.000000e+00> : vector<16xf32>
      %97 = vector.multi_reduction <add>, %96, %cst_48 [1] : vector<16x128xf32> to vector<16xf32>
      %98 = vector.shape_cast %97 : vector<16xf32> to vector<16x1xf32>
      %99 = tpu.reciprocal %98 {approx = true} : vector<16x1xf32> -> vector<16x1xf32>
      %100 = vector.broadcast %99 : vector<16x1xf32> to vector<16x128xf32>
      %101 = arith.mulf %96, %100 : vector<16x128xf32>
      %c0_49 = arith.constant 0 : index
      %c0_50 = arith.constant 0 : index
      %102 = vector.load %arg12[%c0_49, %c0_50] : memref<16x128xf32, #tpu.memory_space<vmem>>, vector<16x128xf32>
      tpu.vector_store %arg12[%c0_49, %c0_50], %101 {strides = array<i32>} : memref<16x128xf32, #tpu.memory_space<vmem>>, vector<16x128xf32>,
      %cst_51 = arith.constant 0.000000e+00 : f32
      %103 = vector.broadcast %cst_51 : f32 to vector<16x32xf32>
      %c0_52 = arith.constant 0 : index
      %c0_53 = arith.constant 0 : index
      %104 = vector.load %arg11[%c0_52, %c0_53] : memref<16x32xf32, #tpu.memory_space<vmem>>, vector<16x32xf32>
      tpu.vector_store %arg11[%c0_52, %c0_53], %103 {strides = array<i32>} : memref<16x32xf32, #tpu.memory_space<vmem>>, vector<16x32xf32>,
    } else {
    }
    %c0 = arith.constant 0 : index
    %c0_1 = arith.constant 0 : index
    %3 = vector.load %arg2[%c0, %c0_1] : memref<16x32xf32, #tpu.memory_space<vmem>>, vector<16x32xf32>
    %4 = arith.truncf %3 : vector<16x32xf32> to vector<16x32xbf16>
    %c0_2 = arith.constant 0 : index
    %c0_3 = arith.constant 0 : index
    %5 = vector.load %arg3[%c0_2, %c0_3] : memref<32x128xbf16, #tpu.memory_space<vmem>>, vector<32x128xbf16>
    %cst = arith.constant dense<0.000000e+00> : vector<16x128xf32>
    %6 = tpu.matmul %4, %5, %cst {dimension_numbers = #tpu.dot_dimension_numbers<[1], [0], [0], [1], [0, 0, 1, 1], [], []>} : vector<16x32xbf16>, vector<32x128xbf16>, vector<16x128xf32> -> vector<16x128xf32>
    %c0_4 = arith.constant 0 : index
    %c0_5 = arith.constant 0 : index
    %7 = vector.load %arg4[%c0_4, %c0_5] : memref<1x128xf32, #tpu.memory_space<vmem>>, vector<1x128xf32>
    %8 = vector.broadcast %7 : vector<1x128xf32> to vector<16x128xf32>
    %9 = arith.addf %6, %8 : vector<16x128xf32>
    %c0_6 = arith.constant 0 : index
    %c0_7 = arith.constant 0 : index
    %10 = vector.load %arg5[%c0_6, %c0_7] : memref<32x128xbf16, #tpu.memory_space<vmem>>, vector<32x128xbf16>
    %cst_8 = arith.constant dense<0.000000e+00> : vector<16x128xf32>
    %11 = tpu.matmul %4, %10, %cst_8 {dimension_numbers = #tpu.dot_dimension_numbers<[1], [0], [0], [1], [0, 0, 1, 1], [], []>} : vector<16x32xbf16>, vector<32x128xbf16>, vector<16x128xf32> -> vector<16x128xf32>
    %c0_9 = arith.constant 0 : index
    %c0_10 = arith.constant 0 : index
    %12 = vector.load %arg6[%c0_9, %c0_10] : memref<1x128xf32, #tpu.memory_space<vmem>>, vector<1x128xf32>
    %13 = vector.broadcast %12 : vector<1x128xf32> to vector<16x128xf32>
    %14 = arith.addf %11, %13 : vector<16x128xf32>
    %cst_11 = arith.constant 5.000000e-01 : f32
    %15 = vector.broadcast %cst_11 : f32 to vector<16x128xf32>
    %16 = arith.mulf %15, %14 : vector<16x128xf32>
    %cst_12 = arith.constant 4.471500e-02 : f32
    %17 = vector.broadcast %cst_12 : f32 to vector<16x128xf32>
    %18 = arith.mulf %17, %14 : vector<16x128xf32>
    %19 = arith.mulf %18, %14 : vector<16x128xf32>
    %20 = arith.mulf %19, %14 : vector<16x128xf32>
    %21 = arith.addf %14, %20 : vector<16x128xf32>
    %cst_13 = arith.constant 0.797884583 : f32
    %22 = vector.broadcast %cst_13 : f32 to vector<16x128xf32>
    %23 = arith.mulf %22, %21 : vector<16x128xf32>
    %24 = math.tanh %23 : vector<16x128xf32>
    %cst_14 = arith.constant 1.000000e+00 : f32
    %25 = vector.broadcast %cst_14 : f32 to vector<16x128xf32>
    %26 = arith.addf %25, %24 : vector<16x128xf32>
    %27 = arith.mulf %16, %26 : vector<16x128xf32>
    %28 = arith.mulf %9, %27 : vector<16x128xf32>
    %29 = arith.truncf %28 : vector<16x128xf32> to vector<16x128xbf16>
    %c0_15 = arith.constant 0 : index
    %c0_16 = arith.constant 0 : index
    %30 = vector.load %arg12[%c0_15, %c0_16] : memref<16x128xf32, #tpu.memory_space<vmem>>, vector<16x128xf32>
    %c0_17 = arith.constant 0 : index
    %c0_18 = arith.constant 0 : index
    %31 = vector.load %arg11[%c0_17, %c0_18] : memref<16x32xf32, #tpu.memory_space<vmem>>, vector<16x32xf32>
    %c0_19 = arith.constant 0 : index
    %c0_20 = arith.constant 0 : index
    %32 = vector.load %arg7[%c0_19, %c0_20] : memref<128x128xbf16, #tpu.memory_space<vmem>>, vector<128x32xbf16>
    %cst_21 = arith.constant dense<0.000000e+00> : vector<16x32xf32>
    %33 = tpu.matmul %29, %32, %cst_21 {dimension_numbers = #tpu.dot_dimension_numbers<[1], [0], [0], [1], [0, 0, 1, 1], [], []>} : vector<16x128xbf16>, vector<128x32xbf16>, vector<16x32xf32> -> vector<16x32xf32>
    %34 = vector.extract_strided_slice %30 {offsets = [0, 0], sizes = [16, 1], strides = [1, 1]} : vector<16x128xf32> to vector<16x1xf32>
    %35 = vector.broadcast %34 : vector<16x1xf32> to vector<16x32xf32>
    %36 = arith.mulf %33, %35 : vector<16x32xf32>
    %37 = arith.addf %31, %36 : vector<16x32xf32>
    %c0_22 = arith.constant 0 : index
    %c32 = arith.constant 32 : index
    %38 = vector.load %arg7[%c0_22, %c32] : memref<128x128xbf16, #tpu.memory_space<vmem>>, vector<128x32xbf16>
    %cst_23 = arith.constant dense<0.000000e+00> : vector<16x32xf32>
    %39 = tpu.matmul %29, %38, %cst_23 {dimension_numbers = #tpu.dot_dimension_numbers<[1], [0], [0], [1], [0, 0, 1, 1], [], []>} : vector<16x128xbf16>, vector<128x32xbf16>, vector<16x32xf32> -> vector<16x32xf32>
    %40 = vector.extract_strided_slice %30 {offsets = [0, 1], sizes = [16, 1], strides = [1, 1]} : vector<16x128xf32> to vector<16x1xf32>
    %41 = vector.broadcast %40 : vector<16x1xf32> to vector<16x32xf32>
    %42 = arith.mulf %39, %41 : vector<16x32xf32>
    %43 = arith.addf %37, %42 : vector<16x32xf32>
    %c0_24 = arith.constant 0 : index
    %c64 = arith.constant 64 : index
    %44 = vector.load %arg7[%c0_24, %c64] : memref<128x128xbf16, #tpu.memory_space<vmem>>, vector<128x32xbf16>
    %cst_25 = arith.constant dense<0.000000e+00> : vector<16x32xf32>
    %45 = tpu.matmul %29, %44, %cst_25 {dimension_numbers = #tpu.dot_dimension_numbers<[1], [0], [0], [1], [0, 0, 1, 1], [], []>} : vector<16x128xbf16>, vector<128x32xbf16>, vector<16x32xf32> -> vector<16x32xf32>
    %46 = vector.extract_strided_slice %30 {offsets = [0, 2], sizes = [16, 1], strides = [1, 1]} : vector<16x128xf32> to vector<16x1xf32>
    %47 = vector.broadcast %46 : vector<16x1xf32> to vector<16x32xf32>
    %48 = arith.mulf %45, %47 : vector<16x32xf32>
    %49 = arith.addf %43, %48 : vector<16x32xf32>
    %c0_26 = arith.constant 0 : index
    %c96 = arith.constant 96 : index
    %50 = vector.load %arg7[%c0_26, %c96] : memref<128x128xbf16, #tpu.memory_space<vmem>>, vector<128x32xbf16>
    %cst_27 = arith.constant dense<0.000000e+00> : vector<16x32xf32>
    %51 = tpu.matmul %29, %50, %cst_27 {dimension_numbers = #tpu.dot_dimension_numbers<[1], [0], [0], [1], [0, 0, 1, 1], [], []>} : vector<16x128xbf16>, vector<128x32xbf16>, vector<16x32xf32> -> vector<16x32xf32>
    %52 = vector.extract_strided_slice %30 {offsets = [0, 3], sizes = [16, 1], strides = [1, 1]} : vector<16x128xf32> to vector<16x1xf32>
    %53 = vector.broadcast %52 : vector<16x1xf32> to vector<16x32xf32>
    %54 = arith.mulf %51, %53 : vector<16x32xf32>
    %55 = arith.addf %49, %54 : vector<16x32xf32>
    %c0_28 = arith.constant 0 : index
    %c0_29 = arith.constant 0 : index
    %56 = vector.load %arg11[%c0_28, %c0_29] : memref<16x32xf32, #tpu.memory_space<vmem>>, vector<16x32xf32>
    tpu.vector_store %arg11[%c0_28, %c0_29], %55 {strides = array<i32>} : memref<16x32xf32, #tpu.memory_space<vmem>>, vector<16x32xf32>,
    %c0_i32_30 = arith.constant 0 : i32
    %57 = arith.cmpi eq, %arg1, %c0_i32_30 : i32
    %58 = arith.extui %57 : i1 to i32
    %c0_i32_31 = arith.constant 0 : i32
    %59 = arith.cmpi ne, %58, %c0_i32_31 : i32
    scf.if %59 {
      %c0_32 = arith.constant 0 : index
      %c0_33 = arith.constant 0 : index
      %60 = vector.load %arg11[%c0_32, %c0_33] : memref<16x32xf32, #tpu.memory_space<vmem>>, vector<16x32xf32>
      %c0_34 = arith.constant 0 : index
      %c0_35 = arith.constant 0 : index
      %61 = vector.load %arg12[%c0_34, %c0_35] : memref<16x128xf32, #tpu.memory_space<vmem>>, vector<16x128xf32>
      %c0_36 = arith.constant 0 : index
      %c0_37 = arith.constant 0 : index
      %62 = vector.load %arg8[%c0_36, %c0_37] : memref<128x32xf32, #tpu.memory_space<vmem>>, vector<128x32xf32>
      %cst_38 = arith.constant dense<0.000000e+00> : vector<16x32xf32>
      %63 = tpu.matmul %61, %62, %cst_38 {dimension_numbers = #tpu.dot_dimension_numbers<[1], [0], [0], [1], [0, 0, 1, 1], [], []>} : vector<16x128xf32>, vector<128x32xf32>, vector<16x32xf32> -> vector<16x32xf32>
      %64 = arith.addf %60, %63 : vector<16x32xf32>
      %c0_39 = arith.constant 0 : index
      %c0_40 = arith.constant 0 : index
      %65 = vector.load %arg11[%c0_39, %c0_40] : memref<16x32xf32, #tpu.memory_space<vmem>>, vector<16x32xf32>
      tpu.vector_store %arg11[%c0_39, %c0_40], %64 {strides = array<i32>} : memref<16x32xf32, #tpu.memory_space<vmem>>, vector<16x32xf32>,
    } else {
    }
    return
  }
  func.func @transform_0(%arg0: i32, %arg1: i32) -> (i32, i32) {
    %c0_i32 = arith.constant 0 : i32
    %c0_i32_0 = arith.constant 0 : i32
    return %arg0, %c0_i32 : i32, i32
  }
  func.func @transform_1(%arg0: i32, %arg1: i32) -> (i32, i32) {
    %c0_i32 = arith.constant 0 : i32
    %c0_i32_0 = arith.constant 0 : i32
    return %c0_i32, %arg1 : i32, i32
  }
  func.func @transform_2(%arg0: i32, %arg1: i32) -> (i32, i32) {
    %c0_i32 = arith.constant 0 : i32
    %c0_i32_0 = arith.constant 0 : i32
    return %c0_i32, %arg1 : i32, i32
  }
  func.func @transform_3(%arg0: i32, %arg1: i32) -> (i32, i32) {
    %c0_i32 = arith.constant 0 : i32
    %c0_i32_0 = arith.constant 0 : i32
    return %c0_i32, %arg1 : i32, i32
  }
  func.func @transform_4(%arg0: i32, %arg1: i32) -> (i32, i32) {
    %c0_i32 = arith.constant 0 : i32
    %c0_i32_0 = arith.constant 0 : i32
    return %c0_i32, %arg1 : i32, i32
  }
  func.func @transform_5(%arg0: i32, %arg1: i32) -> (i32, i32) {
    %c0_i32 = arith.constant 0 : i32
    %c0_i32_0 = arith.constant 0 : i32
    return %arg1, %c0_i32 : i32, i32
  }
  func.func @transform_6(%arg0: i32, %arg1: i32) -> (i32, i32) {
    %c0_i32 = arith.constant 0 : i32
    %c0_i32_0 = arith.constant 0 : i32
    %c0_i32_1 = arith.constant 0 : i32
    return %c0_i32, %c0_i32_0 : i32, i32
  }
  func.func @transform_7(%arg0: i32, %arg1: i32) -> (i32, i32) {
    %c0_i32 = arith.constant 0 : i32
    %c0_i32_0 = arith.constant 0 : i32
    %c0_i32_1 = arith.constant 0 : i32
    return %c0_i32, %c0_i32_0 : i32, i32
  }
  func.func @transform_8(%arg0: i32, %arg1: i32) -> (i32, i32) {
    %c0_i32 = arith.constant 0 : i32
    %c0_i32_0 = arith.constant 0 : i32
    %c0_i32_1 = arith.constant 0 : i32
    return %c0_i32, %c0_i32_0 : i32, i32
  }
  func.func @transform_9(%arg0: i32, %arg1: i32) -> (i32, i32) {
    %c0_i32 = arith.constant 0 : i32
    %c0_i32_0 = arith.constant 0 : i32
    return %arg0, %c0_i32 : i32, i32
  }
}

</mosaic_0001>

<llo_original>
// kernel: tpu_custom_call.1
$region0: #{tpu_custom_call.1}
  #allocation0 [shape = 'u32[]', space=smem, size = 0x4, offset = 0x4, fixed_abs, tag = 'smem constant byte address 0x4 - core index']
  #allocation1 [shape = 'u32[144,128]{1,0:T(1,128)}', space=vmem, size = 0x12000, scoped, tag = 'internal scratch']
  #allocation2 [shape = 'f32[16,128]{1,0:T(8,128)}', space=vmem, size = 0x2000, scoped, tag = 'scratch operand']
  %s0 = inlined_call_operand.vmem [shape: f32[16,32], index: 0, kind: input, shape index: {}]
  %s1 = inlined_call_operand.vmem [shape: bf16[32,128], index: 1, kind: input, shape index: {}]
  %s2 = inlined_call_operand.vmem [shape: f32[1,128], index: 2, kind: input, shape index: {}]
  %s3 = inlined_call_operand.vmem [shape: bf16[32,128], index: 3, kind: input, shape index: {}]
  %s4 = inlined_call_operand.vmem [shape: f32[1,128], index: 4, kind: input, shape index: {}]
  %s5 = inlined_call_operand.vmem [shape: bf16[128,128], index: 5, kind: input, shape index: {}]
  %s6 = inlined_call_operand.vmem [shape: f32[128,32], index: 6, kind: input, shape index: {}]
  %s7 = inlined_call_operand.vmem [shape: f32[32,128], index: 7, kind: input, shape index: {}]
  %s8 = inlined_call_operand.vmem [shape: f32[1,128], index: 8, kind: input, shape index: {}]
  %s9 = inlined_call_operand.hbm [shape: f32[16,32], index: 9, kind: output, shape index: {}]
  %s10 = sld [smem:[#allocation0]]
  $region54: #{tpu_custom_call.1} parent=0
    _
  %s12 = ssub.s32 1, %s10
  %s13 = scalar_select 0, %s12, %s10
  $region1: #{tpu_custom_call.1} parent=0
    #allocation3 [shape = 'u8[8192]{0}', space=vmem, size = 0x2000, scoped, tag = 'output window, operand 0, single buffered']
    #allocation4 [shape = 's32[1]{0}', space=sflag, size = 0x4, scoped, tag = 'scoped memory for tpu_custom_call.1']
    %14 = vsyncpa [#allocation4], 0
    // Predicated region
    $region2: #{tpu_custom_call.1} parent=1 // pred_check
      _
    $region3: #{tpu_custom_call.1} parent=1 // pred_check_branch
      %16 = sbr.rel (0) target = $region5
    $region4: #{tpu_custom_call.1} parent=1 // pred_region
      _
    $region5: #{tpu_custom_call.1} parent=1 // pred_fallthru
      _
    // Predicated region
    $region6: #{tpu_custom_call.1} parent=1 // pred_check
      _
    $region7: #{tpu_custom_call.1} parent=1 // pred_check_branch
      %18 = sbr.rel (0) target = $region9
    $region8: #{tpu_custom_call.1} parent=1 // pred_region
      _
    $region9: #{tpu_custom_call.1} parent=1 // pred_fallthru
      _
    // Predicated region
    $region10: #{tpu_custom_call.1} parent=1 // pred_check
      _
    $region11: #{tpu_custom_call.1} parent=1 // pred_check_branch
      %20 = sbr.rel (0) target = $region13
    $region12: #{tpu_custom_call.1} parent=1 // pred_region
      _
    $region13: #{tpu_custom_call.1} parent=1 // pred_fallthru
      _
    // Predicated region
    $region14: #{tpu_custom_call.1} parent=1 // pred_check
      _
    $region15: #{tpu_custom_call.1} parent=1 // pred_check_branch
      %22 = sbr.rel (0) target = $region17
    $region16: #{tpu_custom_call.1} parent=1 // pred_region
      _
    $region17: #{tpu_custom_call.1} parent=1 // pred_fallthru
      _
    // Predicated region
    $region18: #{tpu_custom_call.1} parent=1 // pred_check
      _
    $region19: #{tpu_custom_call.1} parent=1 // pred_check_branch
      %24 = sbr.rel (0) target = $region21
    $region20: #{tpu_custom_call.1} parent=1 // pred_region
      _
    $region21: #{tpu_custom_call.1} parent=1 // pred_fallthru
      _
    // Predicated region
    $region22: #{tpu_custom_call.1} parent=1 // pred_check
      _
    $region23: #{tpu_custom_call.1} parent=1 // pred_check_branch
      %26 = sbr.rel (0) target = $region25
    $region24: #{tpu_custom_call.1} parent=1 // pred_region
      _
    $region25: #{tpu_custom_call.1} parent=1 // pred_fallthru
      _
    // Predicated region
    $region26: #{tpu_custom_call.1} parent=1 // pred_check
      _
    $region27: #{tpu_custom_call.1} parent=1 // pred_check_branch
      %28 = sbr.rel (0) target = $region29
    $region28: #{tpu_custom_call.1} parent=1 // pred_region
      _
    $region29: #{tpu_custom_call.1} parent=1 // pred_fallthru
      _
    // Predicated region
    $region30: #{tpu_custom_call.1} parent=1 // pred_check
      _
    $region31: #{tpu_custom_call.1} parent=1 // pred_check_branch
      %30 = sbr.rel (0) target = $region33
    $region32: #{tpu_custom_call.1} parent=1 // pred_region
      _
    $region33: #{tpu_custom_call.1} parent=1 // pred_fallthru
      _
    // Predicated region
    $region34: #{tpu_custom_call.1} parent=1 // pred_check
      _
    $region35: #{tpu_custom_call.1} parent=1 // pred_check_branch
      %32 = sbr.rel (0) target = $region37
    $region36: #{tpu_custom_call.1} parent=1 // pred_region
      _
    $region37: #{tpu_custom_call.1} parent=1 // pred_fallthru
      _
    %p34 = scmp.eq.s32.totalorder 0, 0
    // Predicated region
    $region38: #{tpu_custom_call.1} parent=1 // pred_check
      %p35 = pneg %p34
    $region39: #{tpu_custom_call.1} parent=1 // pred_check_branch
      %37 = sbr.rel (%p35) target = $region41
    $region40: #{tpu_custom_call.1} parent=1 // pred_region
      %v38 = vld [vmem:[%s0] sm:$0xff]
      %v39 = vld [vmem:[%s0 + $0x8] sm:$0xff]
      %v40 = vld [vmem:[%s7] sm:$0xff]
      %v41 = vld [vmem:[%s7 + $0x8] sm:$0xff]
      %v42 = vld [vmem:[%s7 + $0x10] sm:$0xff]
      %v43 = vld [vmem:[%s7 + $0x18] sm:$0xff]
      %v44 = vld [vmem:[%s8] sm:$0x1]
      %v46 = vlaneseq
      %v47 = vshrl.u32 %v46, 7
      %v48 = vsub.s32 0, %v47
      %v49 = vrot.slane %v44, %v48
      %vm51 = vcmask 261120
      %v53 = vsel %vm51, %v38, 0
      %v56 = vsel %vm51, %v39, 0
      %58 = vmatprep.subr.mxu0 0.0
      %59 = vmatpush1.msra.mxu0 %v40
      %60 = vmatprep.subr.mxu0 0.0
      %61 = vmatpush1.msra.mxu0 %v41
      %62 = vmatprep.subr.mxu0 0.0
      %63 = vmatpush1.msra.mxu0 %v42
      %64 = vmatprep.subr.mxu0 0.0
      %65 = vmatpush1.msra.mxu0 %v43
      %66 = vmatprep.subr.mxu0 0.0
      %67 = vmatpush1.msra.mxu0 0.0
      %68 = vmatprep.subr.mxu0 0.0
      %69 = vmatpush1.msra.mxu0 0.0
      %70 = vmatprep.subr.mxu0 0.0
      %71 = vmatpush1.msra.mxu0 0.0
      %72 = vmatprep.subr.mxu0 0.0
      %73 = vmatpush1.msra.mxu0 0.0
      %74 = vmatprep.subr.mxu0 0.0
      %75 = vmatpush1.msra.mxu0 0.0
      %76 = vmatprep.subr.mxu0 0.0
      %77 = vmatpush1.msra.mxu0 0.0
      %78 = vmatprep.subr.mxu0 0.0
      %79 = vmatpush1.msra.mxu0 0.0
      %80 = vmatprep.subr.mxu0 0.0
      %81 = vmatpush1.msra.mxu0 0.0
      %82 = vmatprep.subr.mxu0 0.0
      %83 = vmatpush1.msra.mxu0 0.0
      %84 = vmatprep.subr.mxu0 0.0
      %85 = vmatpush1.msra.mxu0 0.0
      %86 = vmatprep.subr.mxu0 0.0
      %87 = vmatpush1.msra.mxu0 0.0
      %88 = vmatprep.subr.mxu0 0.0
      %89 = vmatpush1.msra.mxu0 0.0
      %90 = vmatprep.subr.mxu0 0.0
      %91 = vmatpush1.msra.mxu0 0.0
      %92 = vmatprep.subr.mxu0 0.0
      %93 = vmatpush1.msra.mxu0 0.0
      %94 = vmatprep.subr.mxu0 0.0
      %95 = vmatpush1.msra.mxu0 0.0
      %96 = vmatprep.subr.mxu0 0.0
      %97 = vmatpush1.msra.mxu0 0.0
      %98 = vmatprep.subr.mxu0 0.0
      %99 = vmatpush1.msra.mxu0 0.0
      %100 = vmatprep.subr.mxu0 0.0
      %101 = vmatpush1.msra.mxu0 0.0
      %102 = vmatprep.subr.mxu0 0.0
      %103 = vmatpush1.msra.mxu0 0.0
      %104 = vmatprep.subr.mxu0 0.0
      %105 = vmatpush1.msra.mxu0 0.0
      %106 = vmatprep.subr.mxu0 0.0
      %107 = vmatpush1.msra.mxu0 0.0
      %108 = vmatprep.subr.mxu0 0.0
      %109 = vmatpush1.msra.mxu0 0.0
      %110 = vmatprep.subr.mxu0 0.0
      %111 = vmatpush1.msra.mxu0 0.0
      %112 = vmatprep.subr.mxu0 0.0
      %113 = vmatpush1.msra.mxu0 0.0
      %114 = vmatprep.subr.mxu0 0.0
      %115 = vmatpush1.msra.mxu0 0.0
      %116 = vmatprep.subr.mxu0 0.0
      %117 = vmatpush1.msra.mxu0 0.0
      %118 = vmatprep.subr.mxu0 0.0
      %119 = vmatpush1.msra.mxu0 0.0
      %120 = vmatprep.subr.mxu0 0.0
      %121 = vmatpush1.msra.mxu0 0.0
      %122 = vmatprep.mubr.f32.mxu0 0.0
      %123 = vmatmul.mubr.f32.gmra.mrb[0].mxu0 %v53
      %v124 = vpop.f32.mrb[0].mxu0
      %v125 = vadd.f32 %v49, %v124
      %v126 = vpop.f32.mrb[0].mxu0
      %127 = vmatprep.mubr.f32.mxu0 0.0
      %128 = vmatmul.mubr.f32.gmra.mrb[0].mxu0 %v56
      %v129 = vpop.f32.mrb[0].mxu0
      %v130 = vadd.f32 %v49, %v129
      %v131 = vpop.f32.mrb[0].mxu0
      %132 = vdwg.mxu0
      %v133 = vlaneseq
      %v134 = vand.u32 %v133, 127
      %v135 = vcvt.s32.f32 %v134
      %vm136 = vcmp.lt.s32.totalorder %v134, 4
      %v137 = vsel %vm136, %v125, -1e+30
      %v138 = vsel %vm136, %v130, -1e+30
      %139 = vmax.xlane.f32.xlu0 %v137
      %v140 = vpop.xlane.xlu0 %139
      %141 = vmax.xlane.f32.xlu0 %v138
      %v142 = vpop.xlane.xlu0 %141
      %vm143 = vcmp.eq.f32.partialorder %v137, %v140
      %vm144 = vcmp.eq.f32.partialorder %v138, %v142
      %v145 = vsel %vm143, %v135, 1e+09
      %v146 = vsel %vm144, %v135, 1e+09
      %147 = vmin.xlane.f32.xlu0 %v145
      %v148 = vpop.xlane.xlu0 %147
      %149 = vmin.xlane.f32.xlu0 %v146
      %v150 = vpop.xlane.xlu0 %149
      %vm151 = vcmp.eq.f32.partialorder %v135, %v148
      %vm152 = vcmp.eq.f32.partialorder %v135, %v150
      %v153 = vsel %vm151, -1e+30, %v137
      %v154 = vsel %vm152, -1e+30, %v138
      %155 = vmax.xlane.f32.xlu0 %v153
      %v156 = vpop.xlane.xlu0 %155
      %157 = vmax.xlane.f32.xlu0 %v154
      %v158 = vpop.xlane.xlu0 %157
      %vm159 = vcmp.lt.f32.partialorder %v137, %v156
      %vm160 = vcmp.lt.f32.partialorder %v138, %v158
      %v161 = vsel %vm159, 0.0, %v137
      %v162 = vsel %vm160, 0.0, %v138
      %v163 = vsel %vm136, %v161, -1e+30
      %v164 = vsel %vm136, %v162, -1e+30
      %165 = vmax.xlane.f32.xlu0 %v163
      %v166 = vpop.xlane.xlu0 %165
      %167 = vmax.xlane.f32.xlu0 %v164
      %v168 = vpop.xlane.xlu0 %167
      %v169 = vsub.f32 %v163, %v166
      %v170 = vsub.f32 %v164, %v168
      %v171 = vmul.f32 %v169, 1.442695
      %v172 = vpow.pop %v171
      %v173 = vmul.f32 %v170, 1.442695
      %v174 = vpow.pop %v173
      %175 = vadd.xlane.f32.xlu0 %v172
      %v176 = vpop.xlane.xlu0 %175
      %177 = vadd.xlane.f32.xlu0 %v174
      %v178 = vpop.xlane.xlu0 %177
      %v179 = vrcp.pop %v176
      %v180 = vrcp.pop %v178
      %v181 = vmul.f32 %v172, %v179
      %v182 = vmul.f32 %v174, %v180
      %183 = vst [vmem:[#allocation2] sm:$0xff] %v181
      %184 = vst [vmem:[#allocation2 + $0x8] sm:$0xff] %v182
      %185 = vst.msk [vmem:[#allocation3] sm:$0xff] %vm51, 0.0
      %186 = vst.msk [vmem:[#allocation3 + $0x8] sm:$0xff] %vm51, 0.0
    $region41: #{tpu_custom_call.1} parent=1 // pred_fallthru
      _
    %v187 = vld [vmem:[%s0] sm:$0xff]
    %v188 = vld [vmem:[%s0 + $0x8] sm:$0xff]
    %v189 = vpack.c.bf16 %v188, %v187
    %v190 = vld [vmem:[%s1] sm:$0xf]
    %v191 = vld [vmem:[%s1 + $0x4] sm:$0xf]
    %v192 = vld [vmem:[%s1 + $0x8] sm:$0xf]
    %v193 = vld [vmem:[%s1 + $0xc] sm:$0xf]
    %v194 = vld [vmem:[%s2] sm:$0x1]
    %v196 = vlaneseq
    %v197 = vshrl.u32 %v196, 7
    %v198 = vsub.s32 0, %v197
    %v199 = vrot.slane %v194, %v198
    %v205 = vunpack.c.l.b16 %v190
    %v206 = vunpack.c.l.b16 %v191
    %v207 = vunpack.c.l.b16 %v192
    %v208 = vunpack.c.l.b16 %v193
    %v209 = vpack.c.b16 %v206, %v205
    %v210 = vpack.c.b16 %v208, %v207
    %vm213 = vcmask 261120
    %v215 = vsel %vm213, %v189, 0
    %217 = vmatprep.subr.bf16.mxu0 0
    %218 = vmatpush1.bf16.msra.mxu0 %v209
    %219 = vmatprep.subr.bf16.mxu0 0
    %220 = vmatpush1.bf16.msra.mxu0 %v210
    %221 = vmatprep.subr.bf16.mxu0 0
    %222 = vmatpush1.bf16.msra.mxu0 0
    %223 = vmatprep.subr.bf16.mxu0 0
    %224 = vmatpush1.bf16.msra.mxu0 0
    %225 = vmatprep.subr.bf16.mxu0 0
    %226 = vmatpush1.bf16.msra.mxu0 0
    %227 = vmatprep.subr.bf16.mxu0 0
    %228 = vmatpush1.bf16.msra.mxu0 0
    %229 = vmatprep.subr.bf16.mxu0 0
    %230 = vmatpush1.bf16.msra.mxu0 0
    %231 = vmatprep.subr.bf16.mxu0 0
    %232 = vmatpush1.bf16.msra.mxu0 0
    %233 = vmatprep.subr.bf16.mxu0 0
    %234 = vmatpush1.bf16.msra.mxu0 0
    %235 = vmatprep.subr.bf16.mxu0 0
    %236 = vmatpush1.bf16.msra.mxu0 0
    %237 = vmatprep.subr.bf16.mxu0 0
    %238 = vmatpush1.bf16.msra.mxu0 0
    %239 = vmatprep.subr.bf16.mxu0 0
    %240 = vmatpush1.bf16.msra.mxu0 0
    %241 = vmatprep.subr.bf16.mxu0 0
    %242 = vmatpush1.bf16.msra.mxu0 0
    %243 = vmatprep.subr.bf16.mxu0 0
    %244 = vmatpush1.bf16.msra.mxu0 0
    %245 = vmatprep.subr.bf16.mxu0 0
    %246 = vmatpush1.bf16.msra.mxu0 0
    %247 = vmatprep.subr.bf16.mxu0 0
    %248 = vmatpush1.bf16.msra.mxu0 0
    %249 = vmatprep.mubr.bf16.mxu0 0
    %250 = vmatmul.mubr.bf16.gmra.mrb[0].mxu0 %v215
    %v251 = vpop.f32.mrb[0].mxu0
    %v252 = vadd.f32 %v199, %v251
    %v253 = vpop.f32.mrb[0].mxu0
    %v254 = vpop.f32.mrb[0].mxu0
    %v255 = vadd.f32 %v199, %v254
    %v256 = vpop.f32.mrb[0].mxu0
    %257 = vdwg.mxu0
    %v258 = vld [vmem:[%s3] sm:$0xf]
    %v259 = vld [vmem:[%s3 + $0x4] sm:$0xf]
    %v260 = vld [vmem:[%s3 + $0x8] sm:$0xf]
    %v261 = vld [vmem:[%s3 + $0xc] sm:$0xf]
    %v262 = vld [vmem:[%s4] sm:$0x1]
    %v264 = vlaneseq
    %v265 = vshrl.u32 %v264, 7
    %v266 = vsub.s32 0, %v265
    %v267 = vrot.slane %v262, %v266
    %v273 = vunpack.c.l.b16 %v258
    %v274 = vunpack.c.l.b16 %v259
    %v275 = vunpack.c.l.b16 %v260
    %v276 = vunpack.c.l.b16 %v261
    %v277 = vpack.c.b16 %v274, %v273
    %v278 = vpack.c.b16 %v276, %v275
    %281 = vmatprep.subr.bf16.mxu0 0
    %282 = vmatpush1.bf16.msra.mxu0 %v277
    %283 = vmatprep.subr.bf16.mxu0 0
    %284 = vmatpush1.bf16.msra.mxu0 %v278
    %285 = vmatprep.subr.bf16.mxu0 0
    %286 = vmatpush1.bf16.msra.mxu0 0
    %287 = vmatprep.subr.bf16.mxu0 0
    %288 = vmatpush1.bf16.msra.mxu0 0
    %289 = vmatprep.subr.bf16.mxu0 0
    %290 = vmatpush1.bf16.msra.mxu0 0
    %291 = vmatprep.subr.bf16.mxu0 0
    %292 = vmatpush1.bf16.msra.mxu0 0
    %293 = vmatprep.subr.bf16.mxu0 0
    %294 = vmatpush1.bf16.msra.mxu0 0
    %295 = vmatprep.subr.bf16.mxu0 0
    %296 = vmatpush1.bf16.msra.mxu0 0
    %297 = vmatprep.subr.bf16.mxu0 0
    %298 = vmatpush1.bf16.msra.mxu0 0
    %299 = vmatprep.subr.bf16.mxu0 0
    %300 = vmatpush1.bf16.msra.mxu0 0
    %301 = vmatprep.subr.bf16.mxu0 0
    %302 = vmatpush1.bf16.msra.mxu0 0
    %303 = vmatprep.subr.bf16.mxu0 0
    %304 = vmatpush1.bf16.msra.mxu0 0
    %305 = vmatprep.subr.bf16.mxu0 0
    %306 = vmatpush1.bf16.msra.mxu0 0
    %307 = vmatprep.subr.bf16.mxu0 0
    %308 = vmatpush1.bf16.msra.mxu0 0
    %309 = vmatprep.subr.bf16.mxu0 0
    %310 = vmatpush1.bf16.msra.mxu0 0
    %311 = vmatprep.subr.bf16.mxu0 0
    %312 = vmatpush1.bf16.msra.mxu0 0
    %313 = vmatprep.mubr.bf16.mxu0 0
    %314 = vmatmul.mubr.bf16.gmra.mrb[0].mxu0 %v215
    %v315 = vpop.f32.mrb[0].mxu0
    %v316 = vadd.f32 %v267, %v315
    %v317 = vpop.f32.mrb[0].mxu0
    %v318 = vpop.f32.mrb[0].mxu0
    %v319 = vadd.f32 %v267, %v318
    %v320 = vpop.f32.mrb[0].mxu0
    %321 = vdwg.mxu0
    %v322 = vmul.f32 %v316, 0.5
    %v323 = vmul.f32 %v319, 0.5
    %v324 = vmul.f32 %v316, 0.044715
    %v325 = vmul.f32 %v319, 0.044715
    %v326 = vmul.f32 %v324, %v316
    %v327 = vmul.f32 %v325, %v319
    %v328 = vmul.f32 %v326, %v316
    %v329 = vmul.f32 %v327, %v319
    %v330 = vadd.f32 %v316, %v328
    %v331 = vadd.f32 %v319, %v329
    %v332 = vmul.f32 %v330, 0.7978846
    %v333 = vmul.f32 %v331, 0.7978846
    %v334 = vtanh.pop %v332
    %v335 = vtanh.pop %v333
    %v336 = vadd.f32 %v334, 1.0
    %v337 = vadd.f32 %v335, 1.0
    %v338 = vmul.f32 %v322, %v336
    %v339 = vmul.f32 %v323, %v337
    %v340 = vmul.f32 %v252, %v338
    %v341 = vmul.f32 %v255, %v339
    %v342 = vpack.c.bf16 %v341, %v340
    %v343 = vld [vmem:[#allocation2] sm:$0xff]
    %v344 = vld [vmem:[#allocation2 + $0x8] sm:$0xff]
    %v345 = vld [vmem:[#allocation3] sm:$0xff]
    %v346 = vld [vmem:[#allocation3 + $0x8] sm:$0xff]
    %v347 = vld [vmem:[%s5] sm:$0xf]
    %v348 = vld [vmem:[%s5 + $0x4] sm:$0xf]
    %v349 = vld [vmem:[%s5 + $0x8] sm:$0xf]
    %v350 = vld [vmem:[%s5 + $0xc] sm:$0xf]
    %v351 = vld [vmem:[%s5 + $0x10] sm:$0xf]
    %v352 = vld [vmem:[%s5 + $0x14] sm:$0xf]
    %v353 = vld [vmem:[%s5 + $0x18] sm:$0xf]
    %v354 = vld [vmem:[%s5 + $0x1c] sm:$0xf]
    %v355 = vld [vmem:[%s5 + $0x20] sm:$0xf]
    %v356 = vld [vmem:[%s5 + $0x24] sm:$0xf]
    %v357 = vld [vmem:[%s5 + $0x28] sm:$0xf]
    %v358 = vld [vmem:[%s5 + $0x2c] sm:$0xf]
    %v359 = vld [vmem:[%s5 + $0x30] sm:$0xf]
    %v360 = vld [vmem:[%s5 + $0x34] sm:$0xf]
    %v361 = vld [vmem:[%s5 + $0x38] sm:$0xf]
    %v362 = vld [vmem:[%s5 + $0x3c] sm:$0xf]
    %v379 = vunpack.c.l.b16 %v347
    %v380 = vunpack.c.l.b16 %v348
    %v381 = vunpack.c.l.b16 %v349
    %v382 = vunpack.c.l.b16 %v350
    %v383 = vunpack.c.l.b16 %v351
    %v384 = vunpack.c.l.b16 %v352
    %v385 = vunpack.c.l.b16 %v353
    %v386 = vunpack.c.l.b16 %v354
    %v387 = vunpack.c.l.b16 %v355
    %v388 = vunpack.c.l.b16 %v356
    %v389 = vunpack.c.l.b16 %v357
    %v390 = vunpack.c.l.b16 %v358
    %v391 = vunpack.c.l.b16 %v359
    %v392 = vunpack.c.l.b16 %v360
    %v393 = vunpack.c.l.b16 %v361
    %v394 = vunpack.c.l.b16 %v362
    %v395 = vpack.c.b16 %v380, %v379
    %v396 = vpack.c.b16 %v382, %v381
    %v397 = vpack.c.b16 %v384, %v383
    %v398 = vpack.c.b16 %v386, %v385
    %v399 = vpack.c.b16 %v388, %v387
    %v400 = vpack.c.b16 %v390, %v389
    %v401 = vpack.c.b16 %v392, %v391
    %v402 = vpack.c.b16 %v394, %v393
    %411 = vmatprep.subr.bf16.mxu0 0
    %412 = vmatpush1.bf16.msra.mxu0 %v395
    %413 = vmatprep.subr.bf16.mxu0 0
    %414 = vmatpush1.bf16.msra.mxu0 %v396
    %415 = vmatprep.subr.bf16.mxu0 0
    %416 = vmatpush1.bf16.msra.mxu0 %v397
    %417 = vmatprep.subr.bf16.mxu0 0
    %418 = vmatpush1.bf16.msra.mxu0 %v398
    %419 = vmatprep.subr.bf16.mxu0 0
    %420 = vmatpush1.bf16.msra.mxu0 %v399
    %421 = vmatprep.subr.bf16.mxu0 0
    %422 = vmatpush1.bf16.msra.mxu0 %v400
    %423 = vmatprep.subr.bf16.mxu0 0
    %424 = vmatpush1.bf16.msra.mxu0 %v401
    %425 = vmatprep.subr.bf16.mxu0 0
    %426 = vmatpush1.bf16.msra.mxu0 %v402
    %427 = vmatprep.subr.bf16.mxu0 0
    %428 = vmatpush1.bf16.msra.mxu0 0
    %429 = vmatprep.subr.bf16.mxu0 0
    %430 = vmatpush1.bf16.msra.mxu0 0
    %431 = vmatprep.subr.bf16.mxu0 0
    %432 = vmatpush1.bf16.msra.mxu0 0
    %433 = vmatprep.subr.bf16.mxu0 0
    %434 = vmatpush1.bf16.msra.mxu0 0
    %435 = vmatprep.subr.bf16.mxu0 0
    %436 = vmatpush1.bf16.msra.mxu0 0
    %437 = vmatprep.subr.bf16.mxu0 0
    %438 = vmatpush1.bf16.msra.mxu0 0
    %439 = vmatprep.subr.bf16.mxu0 0
    %440 = vmatpush1.bf16.msra.mxu0 0
    %441 = vmatprep.subr.bf16.mxu0 0
    %442 = vmatpush1.bf16.msra.mxu0 0
    %443 = vmatprep.mubr.bf16.mxu0 0
    %444 = vmatmul.mubr.bf16.gmra.mrb[0].mxu0 %v342
    %v445 = vpop.f32.mrb[0].mxu0
    %v446 = vadd.f32 0.0, %v445
    %v447 = vpop.f32.mrb[0].mxu0
    %v448 = vpop.f32.mrb[0].mxu0
    %v449 = vadd.f32 0.0, %v448
    %v450 = vpop.f32.mrb[0].mxu0
    %451 = vdwg.mxu0
    %453 = vset.pattern.permute.xlu0 0
    %454 = vperm.xlu0 %453, %v343
    %v455 = vpop.permute.xlu0 %454
    %458 = vset.pattern.permute.xlu0 0
    %459 = vperm.xlu0 %458, %v344
    %v460 = vpop.permute.xlu0 %459
    %v462 = vmul.f32 %v446, %v455
    %v463 = vmul.f32 %v449, %v460
    %v464 = vadd.f32 %v345, %v462
    %v465 = vadd.f32 %v346, %v463
    %466 = vrot.lane.b32.xlu0 %v395, 96
    %v467 = vpop.permute.xlu0 %466
    %468 = vrot.lane.b32.xlu0 %v396, 96
    %v469 = vpop.permute.xlu0 %468
    %470 = vrot.lane.b32.xlu0 %v397, 96
    %v471 = vpop.permute.xlu0 %470
    %472 = vrot.lane.b32.xlu0 %v398, 96
    %v473 = vpop.permute.xlu0 %472
    %474 = vrot.lane.b32.xlu0 %v399, 96
    %v475 = vpop.permute.xlu0 %474
    %476 = vrot.lane.b32.xlu0 %v400, 96
    %v477 = vpop.permute.xlu0 %476
    %478 = vrot.lane.b32.xlu0 %v401, 96
    %v479 = vpop.permute.xlu0 %478
    %480 = vrot.lane.b32.xlu0 %v402, 96
    %v481 = vpop.permute.xlu0 %480
    %490 = vmatprep.subr.bf16.mxu0 0
    %491 = vmatpush1.bf16.msra.mxu0 %v467
    %492 = vmatprep.subr.bf16.mxu0 0
    %493 = vmatpush1.bf16.msra.mxu0 %v469
    %494 = vmatprep.subr.bf16.mxu0 0
    %495 = vmatpush1.bf16.msra.mxu0 %v471
    %496 = vmatprep.subr.bf16.mxu0 0
    %497 = vmatpush1.bf16.msra.mxu0 %v473
    %498 = vmatprep.subr.bf16.mxu0 0
    %499 = vmatpush1.bf16.msra.mxu0 %v475
    %500 = vmatprep.subr.bf16.mxu0 0
    %501 = vmatpush1.bf16.msra.mxu0 %v477
    %502 = vmatprep.subr.bf16.mxu0 0
    %503 = vmatpush1.bf16.msra.mxu0 %v479
    %504 = vmatprep.subr.bf16.mxu0 0
    %505 = vmatpush1.bf16.msra.mxu0 %v481
    %506 = vmatprep.subr.bf16.mxu0 0
    %507 = vmatpush1.bf16.msra.mxu0 0
    %508 = vmatprep.subr.bf16.mxu0 0
    %509 = vmatpush1.bf16.msra.mxu0 0
    %510 = vmatprep.subr.bf16.mxu0 0
    %511 = vmatpush1.bf16.msra.mxu0 0
    %512 = vmatprep.subr.bf16.mxu0 0
    %513 = vmatpush1.bf16.msra.mxu0 0
    %514 = vmatprep.subr.bf16.mxu0 0
    %515 = vmatpush1.bf16.msra.mxu0 0
    %516 = vmatprep.subr.bf16.mxu0 0
    %517 = vmatpush1.bf16.msra.mxu0 0
    %518 = vmatprep.subr.bf16.mxu0 0
    %519 = vmatpush1.bf16.msra.mxu0 0
    %520 = vmatprep.subr.bf16.mxu0 0
    %521 = vmatpush1.bf16.msra.mxu0 0
    %522 = vmatprep.mubr.bf16.mxu0 0
    %523 = vmatmul.mubr.bf16.gmra.mrb[0].mxu0 %v342
    %v524 = vpop.f32.mrb[0].mxu0
    %v525 = vadd.f32 0.0, %v524
    %v526 = vpop.f32.mrb[0].mxu0
    %v527 = vpop.f32.mrb[0].mxu0
    %v528 = vadd.f32 0.0, %v527
    %v529 = vpop.f32.mrb[0].mxu0
    %530 = vdwg.mxu0
    %531 = vset.pattern.permute.xlu0 1
    %532 = vperm.xlu0 %531, %v343
    %v533 = vpop.permute.xlu0 %532
    %535 = vset.pattern.permute.xlu0 1
    %536 = vperm.xlu0 %535, %v344
    %v537 = vpop.permute.xlu0 %536
    %v539 = vmul.f32 %v525, %v533
    %v540 = vmul.f32 %v528, %v537
    %v541 = vadd.f32 %v464, %v539
    %v542 = vadd.f32 %v465, %v540
    %543 = vrot.lane.b32.xlu0 %v395, 64
    %v544 = vpop.permute.xlu0 %543
    %545 = vrot.lane.b32.xlu0 %v396, 64
    %v546 = vpop.permute.xlu0 %545
    %547 = vrot.lane.b32.xlu0 %v397, 64
    %v548 = vpop.permute.xlu0 %547
    %549 = vrot.lane.b32.xlu0 %v398, 64
    %v550 = vpop.permute.xlu0 %549
    %551 = vrot.lane.b32.xlu0 %v399, 64
    %v552 = vpop.permute.xlu0 %551
    %553 = vrot.lane.b32.xlu0 %v400, 64
    %v554 = vpop.permute.xlu0 %553
    %555 = vrot.lane.b32.xlu0 %v401, 64
    %v556 = vpop.permute.xlu0 %555
    %557 = vrot.lane.b32.xlu0 %v402, 64
    %v558 = vpop.permute.xlu0 %557
    %567 = vmatprep.subr.bf16.mxu0 0
    %568 = vmatpush1.bf16.msra.mxu0 %v544
    %569 = vmatprep.subr.bf16.mxu0 0
    %570 = vmatpush1.bf16.msra.mxu0 %v546
    %571 = vmatprep.subr.bf16.mxu0 0
    %572 = vmatpush1.bf16.msra.mxu0 %v548
    %573 = vmatprep.subr.bf16.mxu0 0
    %574 = vmatpush1.bf16.msra.mxu0 %v550
    %575 = vmatprep.subr.bf16.mxu0 0
    %576 = vmatpush1.bf16.msra.mxu0 %v552
    %577 = vmatprep.subr.bf16.mxu0 0
    %578 = vmatpush1.bf16.msra.mxu0 %v554
    %579 = vmatprep.subr.bf16.mxu0 0
    %580 = vmatpush1.bf16.msra.mxu0 %v556
    %581 = vmatprep.subr.bf16.mxu0 0
    %582 = vmatpush1.bf16.msra.mxu0 %v558
    %583 = vmatprep.subr.bf16.mxu0 0
    %584 = vmatpush1.bf16.msra.mxu0 0
    %585 = vmatprep.subr.bf16.mxu0 0
    %586 = vmatpush1.bf16.msra.mxu0 0
    %587 = vmatprep.subr.bf16.mxu0 0
    %588 = vmatpush1.bf16.msra.mxu0 0
    %589 = vmatprep.subr.bf16.mxu0 0
    %590 = vmatpush1.bf16.msra.mxu0 0
    %591 = vmatprep.subr.bf16.mxu0 0
    %592 = vmatpush1.bf16.msra.mxu0 0
    %593 = vmatprep.subr.bf16.mxu0 0
    %594 = vmatpush1.bf16.msra.mxu0 0
    %595 = vmatprep.subr.bf16.mxu0 0
    %596 = vmatpush1.bf16.msra.mxu0 0
    %597 = vmatprep.subr.bf16.mxu0 0
    %598 = vmatpush1.bf16.msra.mxu0 0
    %599 = vmatprep.mubr.bf16.mxu0 0
    %600 = vmatmul.mubr.bf16.gmra.mrb[0].mxu0 %v342
    %v601 = vpop.f32.mrb[0].mxu0
    %v602 = vadd.f32 0.0, %v601
    %v603 = vpop.f32.mrb[0].mxu0
    %v604 = vpop.f32.mrb[0].mxu0
    %v605 = vadd.f32 0.0, %v604
    %v606 = vpop.f32.mrb[0].mxu0
    %607 = vdwg.mxu0
    %608 = vset.pattern.permute.xlu0 2
    %609 = vperm.xlu0 %608, %v343
    %v610 = vpop.permute.xlu0 %609
    %612 = vset.pattern.permute.xlu0 2
    %613 = vperm.xlu0 %612, %v344
    %v614 = vpop.permute.xlu0 %613
    %v616 = vmul.f32 %v602, %v610
    %v617 = vmul.f32 %v605, %v614
    %v618 = vadd.f32 %v541, %v616
    %v619 = vadd.f32 %v542, %v617
    %620 = vrot.lane.b32.xlu0 %v395, 32
    %v621 = vpop.permute.xlu0 %620
    %622 = vrot.lane.b32.xlu0 %v396, 32
    %v623 = vpop.permute.xlu0 %622
    %624 = vrot.lane.b32.xlu0 %v397, 32
    %v625 = vpop.permute.xlu0 %624
    %626 = vrot.lane.b32.xlu0 %v398, 32
    %v627 = vpop.permute.xlu0 %626
    %628 = vrot.lane.b32.xlu0 %v399, 32
    %v629 = vpop.permute.xlu0 %628
    %630 = vrot.lane.b32.xlu0 %v400, 32
    %v631 = vpop.permute.xlu0 %630
    %632 = vrot.lane.b32.xlu0 %v401, 32
    %v633 = vpop.permute.xlu0 %632
    %634 = vrot.lane.b32.xlu0 %v402, 32
    %v635 = vpop.permute.xlu0 %634
    %644 = vmatprep.subr.bf16.mxu0 0
    %645 = vmatpush1.bf16.msra.mxu0 %v621
    %646 = vmatprep.subr.bf16.mxu0 0
    %647 = vmatpush1.bf16.msra.mxu0 %v623
    %648 = vmatprep.subr.bf16.mxu0 0
    %649 = vmatpush1.bf16.msra.mxu0 %v625
    %650 = vmatprep.subr.bf16.mxu0 0
    %651 = vmatpush1.bf16.msra.mxu0 %v627
    %652 = vmatprep.subr.bf16.mxu0 0
    %653 = vmatpush1.bf16.msra.mxu0 %v629
    %654 = vmatprep.subr.bf16.mxu0 0
    %655 = vmatpush1.bf16.msra.mxu0 %v631
    %656 = vmatprep.subr.bf16.mxu0 0
    %657 = vmatpush1.bf16.msra.mxu0 %v633
    %658 = vmatprep.subr.bf16.mxu0 0
    %659 = vmatpush1.bf16.msra.mxu0 %v635
    %660 = vmatprep.subr.bf16.mxu0 0
    %661 = vmatpush1.bf16.msra.mxu0 0
    %662 = vmatprep.subr.bf16.mxu0 0
    %663 = vmatpush1.bf16.msra.mxu0 0
    %664 = vmatprep.subr.bf16.mxu0 0
    %665 = vmatpush1.bf16.msra.mxu0 0
    %666 = vmatprep.subr.bf16.mxu0 0
    %667 = vmatpush1.bf16.msra.mxu0 0
    %668 = vmatprep.subr.bf16.mxu0 0
    %669 = vmatpush1.bf16.msra.mxu0 0
    %670 = vmatprep.subr.bf16.mxu0 0
    %671 = vmatpush1.bf16.msra.mxu0 0
    %672 = vmatprep.subr.bf16.mxu0 0
    %673 = vmatpush1.bf16.msra.mxu0 0
    %674 = vmatprep.subr.bf16.mxu0 0
    %675 = vmatpush1.bf16.msra.mxu0 0
    %676 = vmatprep.mubr.bf16.mxu0 0
    %677 = vmatmul.mubr.bf16.gmra.mrb[0].mxu0 %v342
    %v678 = vpop.f32.mrb[0].mxu0
    %v679 = vadd.f32 0.0, %v678
    %v680 = vpop.f32.mrb[0].mxu0
    %v681 = vpop.f32.mrb[0].mxu0
    %v682 = vadd.f32 0.0, %v681
    %v683 = vpop.f32.mrb[0].mxu0
    %684 = vdwg.mxu0
    %685 = vset.pattern.permute.xlu0 3
    %686 = vperm.xlu0 %685, %v343
    %v687 = vpop.permute.xlu0 %686
    %689 = vset.pattern.permute.xlu0 3
    %690 = vperm.xlu0 %689, %v344
    %v691 = vpop.permute.xlu0 %690
    %v693 = vmul.f32 %v679, %v687
    %v694 = vmul.f32 %v682, %v691
    %v695 = vadd.f32 %v618, %v693
    %v696 = vadd.f32 %v619, %v694
    %697 = vst.msk [vmem:[#allocation3] sm:$0xff] %vm213, %v695
    %698 = vst.msk [vmem:[#allocation3 + $0x8] sm:$0xff] %vm213, %v696
    // Predicated region
    $region42: #{tpu_custom_call.1} parent=1 // pred_check
      %p699 = pneg %p34
    $region43: #{tpu_custom_call.1} parent=1 // pred_check_branch
      %701 = sbr.rel (%p699) target = $region45
    $region44: #{tpu_custom_call.1} parent=1 // pred_region
      %v702 = vld [vmem:[#allocation3] sm:$0xff]
      %v703 = vld [vmem:[#allocation3 + $0x8] sm:$0xff]
      %v704 = vld [vmem:[#allocation2] sm:$0xff]
      %v705 = vld [vmem:[#allocation2 + $0x8] sm:$0xff]
      %v706 = vld [vmem:[%s6] sm:$0xff]
      %v707 = vld [vmem:[%s6 + $0x8] sm:$0xff]
      %v708 = vld [vmem:[%s6 + $0x10] sm:$0xff]
      %v709 = vld [vmem:[%s6 + $0x18] sm:$0xff]
      %v710 = vld [vmem:[%s6 + $0x20] sm:$0xff]
      %v711 = vld [vmem:[%s6 + $0x28] sm:$0xff]
      %v712 = vld [vmem:[%s6 + $0x30] sm:$0xff]
      %v713 = vld [vmem:[%s6 + $0x38] sm:$0xff]
      %v714 = vld [vmem:[%s6 + $0x40] sm:$0xff]
      %v715 = vld [vmem:[%s6 + $0x48] sm:$0xff]
      %v716 = vld [vmem:[%s6 + $0x50] sm:$0xff]
      %v717 = vld [vmem:[%s6 + $0x58] sm:$0xff]
      %v718 = vld [vmem:[%s6 + $0x60] sm:$0xff]
      %v719 = vld [vmem:[%s6 + $0x68] sm:$0xff]
      %v720 = vld [vmem:[%s6 + $0x70] sm:$0xff]
      %v721 = vld [vmem:[%s6 + $0x78] sm:$0xff]
      %722 = vmatprep.subr.mxu0 0.0
      %723 = vmatpush1.msra.mxu0 %v706
      %724 = vmatprep.subr.mxu0 0.0
      %725 = vmatpush1.msra.mxu0 %v707
      %726 = vmatprep.subr.mxu0 0.0
      %727 = vmatpush1.msra.mxu0 %v708
      %728 = vmatprep.subr.mxu0 0.0
      %729 = vmatpush1.msra.mxu0 %v709
      %730 = vmatprep.subr.mxu0 0.0
      %731 = vmatpush1.msra.mxu0 %v710
      %732 = vmatprep.subr.mxu0 0.0
      %733 = vmatpush1.msra.mxu0 %v711
      %734 = vmatprep.subr.mxu0 0.0
      %735 = vmatpush1.msra.mxu0 %v712
      %736 = vmatprep.subr.mxu0 0.0
      %737 = vmatpush1.msra.mxu0 %v713
      %738 = vmatprep.subr.mxu0 0.0
      %739 = vmatpush1.msra.mxu0 %v714
      %740 = vmatprep.subr.mxu0 0.0
      %741 = vmatpush1.msra.mxu0 %v715
      %742 = vmatprep.subr.mxu0 0.0
      %743 = vmatpush1.msra.mxu0 %v716
      %744 = vmatprep.subr.mxu0 0.0
      %745 = vmatpush1.msra.mxu0 %v717
      %746 = vmatprep.subr.mxu0 0.0
      %747 = vmatpush1.msra.mxu0 %v718
      %748 = vmatprep.subr.mxu0 0.0
      %749 = vmatpush1.msra.mxu0 %v719
      %750 = vmatprep.subr.mxu0 0.0
      %751 = vmatpush1.msra.mxu0 %v720
      %752 = vmatprep.subr.mxu0 0.0
      %753 = vmatpush1.msra.mxu0 %v721
      %754 = vmatprep.subr.mxu0 0.0
      %755 = vmatpush1.msra.mxu0 0.0
      %756 = vmatprep.subr.mxu0 0.0
      %757 = vmatpush1.msra.mxu0 0.0
      %758 = vmatprep.subr.mxu0 0.0
      %759 = vmatpush1.msra.mxu0 0.0
      %760 = vmatprep.subr.mxu0 0.0
      %761 = vmatpush1.msra.mxu0 0.0
      %762 = vmatprep.subr.mxu0 0.0
      %763 = vmatpush1.msra.mxu0 0.0
      %764 = vmatprep.subr.mxu0 0.0
      %765 = vmatpush1.msra.mxu0 0.0
      %766 = vmatprep.subr.mxu0 0.0
      %767 = vmatpush1.msra.mxu0 0.0
      %768 = vmatprep.subr.mxu0 0.0
      %769 = vmatpush1.msra.mxu0 0.0
      %770 = vmatprep.subr.mxu0 0.0
      %771 = vmatpush1.msra.mxu0 0.0
      %772 = vmatprep.subr.mxu0 0.0
      %773 = vmatpush1.msra.mxu0 0.0
      %774 = vmatprep.subr.mxu0 0.0
      %775 = vmatpush1.msra.mxu0 0.0
      %776 = vmatprep.subr.mxu0 0.0
      %777 = vmatpush1.msra.mxu0 0.0
      %778 = vmatprep.subr.mxu0 0.0
      %779 = vmatpush1.msra.mxu0 0.0
      %780 = vmatprep.subr.mxu0 0.0
      %781 = vmatpush1.msra.mxu0 0.0
      %782 = vmatprep.subr.mxu0 0.0
      %783 = vmatpush1.msra.mxu0 0.0
      %784 = vmatprep.subr.mxu0 0.0
      %785 = vmatpush1.msra.mxu0 0.0
      %786 = vmatprep.mubr.f32.mxu0 0.0
      %787 = vmatmul.mubr.f32.gmra.mrb[0].mxu0 %v704
      %v788 = vpop.f32.mrb[0].mxu0
      %v789 = vadd.f32 0.0, %v788
      %v790 = vpop.f32.mrb[0].mxu0
      %791 = vmatprep.mubr.f32.mxu0 0.0
      %792 = vmatmul.mubr.f32.gmra.mrb[0].mxu0 %v705
      %v793 = vpop.f32.mrb[0].mxu0
      %v794 = vadd.f32 0.0, %v793
      %v795 = vpop.f32.mrb[0].mxu0
      %796 = vdwg.mxu0
      %v797 = vadd.f32 %v702, %v789
      %v798 = vadd.f32 %v703, %v794
      %799 = vst.msk [vmem:[#allocation3] sm:$0xff] %vm213, %v797
      %800 = vst.msk [vmem:[#allocation3 + $0x8] sm:$0xff] %vm213, %v798
    $region45: #{tpu_custom_call.1} parent=1 // pred_fallthru
      _
    // Predicated region
    $region46: #{tpu_custom_call.1} parent=1 // pred_check
      _
    $region47: #{tpu_custom_call.1} parent=1 // pred_check_branch
      %802 = sbr.rel (0) target = $region49
    $region48: #{tpu_custom_call.1} parent=1 // pred_region
      %s804 = ssub.s32 256, 256
      %805 = vsyncadd [#allocation4], %s804
      %s806 = sshll.u32 [#allocation3], 4
      %s807 = int_to_ptr.vmem [resolvable:$true] %s806
      %812 = dma.vmem_to_hbm [thread:$0]  %s807, 256, %s9, [#allocation4], 128, 128, 8
    $region49: #{tpu_custom_call.1} parent=1 // pred_fallthru
      _
    // Predicated region
    $region50: #{tpu_custom_call.1} parent=1 // pred_check
      _
    $region51: #{tpu_custom_call.1} parent=1 // pred_check_branch
      %814 = sbr.rel (0) target = $region53
    $region52: #{tpu_custom_call.1} parent=1 // pred_region
      %815 = dma.done [#allocation4], 256
    $region53: #{tpu_custom_call.1} parent=1 // pred_fallthru
      _
    %816 = vsyncpa [#allocation4], 1

</llo_original>
